<compile_context>
chip_gen: v7x
topology: tpu7x:2x2x1
jax: 0.10.0
libtpu: 0.0.40
codegen_flags: <defaults>
</compile_context>

<pallas_src>
import functools
import math

import jax
import jax.numpy as jnp
from jax.experimental import pallas as pl
from jax.experimental.pallas import tpu as pltpu

D_PAD = 128      # hidden/action widths padded to one full lane group
B_TILE = 512     # default batch rows per grid step (tunable; multiple of 8)


# ----------------------------------------------------------------------------
# Kernel
# ----------------------------------------------------------------------------
def _mlp_softmax_kernel(x_ref, w1_ref, w_ref, b_ref, o_ref, *, n_layers, n_actions):
    """x_ref:(Bt,nS) f32; w1_ref:(nS,128) bf16; w_ref:(L-1,128,128) bf16;
    b_ref:(L,1,128) f32; o_ref:(Bt,128) f32."""
    # Layer 0: contract directly over K = nS (no 128-lane input padding).
    x = x_ref[...].astype(jnp.bfloat16)
    h = jnp.dot(x, w1_ref[...], preferred_element_type=jnp.float32) + b_ref[0]

    # Remaining layers (static unroll): ReLU between layers only.
    for li in range(1, n_layers):
        h = jnp.maximum(h, 0.0)
        h = jnp.dot(h.astype(jnp.bfloat16), w_ref[li - 1],
                    preferred_element_type=jnp.float32) + b_ref[li]

    # Additive mask for padded action lanes: (1,128), broadcast over rows.
    lane = jax.lax.broadcasted_iota(jnp.int32, (1, h.shape[1]), 1)
    neg = jnp.where(lane < n_actions, 0.0, -1e30).astype(jnp.float32)
    logits = h + neg

    # Softmax in f32.  Exact reciprocal: probabilities feed Categorical.
    m = jnp.max(logits, axis=1, keepdims=True)
    e = jnp.exp(logits - m)                                 # pad lanes -> 0
    denom = jnp.sum(e, axis=1, keepdims=True)
    o_ref[...] = e * pl.reciprocal(denom, approx=False)


# ----------------------------------------------------------------------------
# Host-side helpers
# ----------------------------------------------------------------------------
def pack_params(params, d_pad=D_PAD):
    """Pack (W(in,out), b(out)) params:
       * layer 0 weight -> (nS, d_pad) bf16 (rows are real features, no pad)
       * layers 1..L-1  -> stacked (L-1, d_pad, d_pad) bf16, zero-padded
       * biases         -> stacked (L, 1, d_pad) f32, zero-padded
    Zero padding is exact: padded hidden units see zero weights + zero bias,
    relu(0)=0, their outgoing weights are zero; padded output lanes are
    masked inside the kernel before the softmax."""
    assert len(params) >= 2, "expected at least one hidden layer"
    (w0, b0), rest = params[0], params[1:]
    nS, fo0 = w0.shape
    w1 = (jnp.zeros((nS, d_pad), jnp.float32)
          .at[:, :fo0].set(jnp.asarray(w0, jnp.float32))).astype(jnp.bfloat16)
    bs = [jnp.zeros((1, d_pad), jnp.float32)
          .at[:, :fo0].set(jnp.asarray(b0, jnp.float32).reshape(1, -1))]
    ws = []
    for w, b in rest:
        fi, fo = w.shape
        wp = (jnp.zeros((d_pad, d_pad), jnp.float32)
              .at[:fi, :fo].set(jnp.asarray(w, jnp.float32))).astype(jnp.bfloat16)
        bp = (jnp.zeros((1, d_pad), jnp.float32)
              .at[:, :fo].set(jnp.asarray(b, jnp.float32).reshape(1, -1)))
        ws.append(wp)
        bs.append(bp)
    return w1, jnp.stack(ws), jnp.stack(bs)   # (nS,128) bf16, (L-1,128,128) bf16, (L,1,128) f32


def _choose_tile(B, b_tile):
    """Batch rows per grid step: multiple of 8; aim for >=2 grid steps so both
    v7x TensorCores get work; tiny tile for tiny batches."""
    if B <= 8:
        return 8
    half = -(-B // 2)
    tile = min(b_tile, -(-half // 8) * 8)
    return max(tile, 8)


def policy_forward_batched(states, w1, w_rest, b_packed, n_actions, *, b_tile=B_TILE):
    """states: (B, nS) float.  Returns softmax probabilities (B, n_actions) f32."""
    states = jnp.asarray(states, jnp.float32)
    B, nS = states.shape
    n_layers = b_packed.shape[0]
    d_pad = b_packed.shape[-1]

    tile = _choose_tile(B, b_tile)
    b_pad = tile * pl.cdiv(B, tile)
    x = states
    if b_pad != B:
        x = jnp.zeros((b_pad, nS), jnp.float32).at[:B].set(states)

    kernel = functools.partial(_mlp_softmax_kernel,
                               n_layers=n_layers, n_actions=n_actions)

    out = pl.pallas_call(
        kernel,
        out_shape=jax.ShapeDtypeStruct((b_pad, d_pad), jnp.float32),
        grid_spec=pltpu.PrefetchScalarGridSpec(
            num_scalar_prefetch=0,
            grid=(b_pad // tile,),
            in_specs=[
                pl.BlockSpec((tile, nS), lambda i: (i, 0)),                      # states (K = nS)
                pl.BlockSpec((nS, d_pad), lambda i: (0, 0)),                     # layer-0 weight (resident)
                pl.BlockSpec((n_layers - 1, d_pad, d_pad), lambda i: (0, 0, 0)), # remaining weights (resident)
                pl.BlockSpec((n_layers, 1, d_pad), lambda i: (0, 0, 0)),         # biases (resident)
            ],
            out_specs=pl.BlockSpec((tile, d_pad), lambda i: (i, 0)),             # lane-dense output
        ),
        compiler_params=pltpu.CompilerParams(dimension_semantics=("parallel",)),
    )(x, w1, w_rest, b_packed)

    return out[:B, :n_actions]


def policy_forward(state, w1, w_rest, b_packed, n_actions):
    """Single-state path, matching `F.softmax(network(state.unsqueeze(0)), dim=1)` -> (1, nA)."""
    state = jnp.asarray(state, jnp.float32).reshape(1, -1)
    return policy_forward_batched(state, w1, w_rest, b_packed, n_actions)


def init_params(key, nS, nA, n_fcs):
    """Mimic nn.Linear default init: U[-1/sqrt(fan_in), 1/sqrt(fan_in)]."""
    dims = [nS] + list(n_fcs) + [nA]
    params = []
    for fan_in, fan_out in zip(dims[:-1], dims[1:]):
        key, kw, kb = jax.random.split(key, 3)
        bound = 1.0 / math.sqrt(fan_in)
        w = jax.random.uniform(kw, (fan_in, fan_out), jnp.float32, -bound, bound)
        b = jax.random.uniform(kb, (1, fan_out), jnp.float32, -bound, bound)
        params.append((w, b))
    return params


def ref_forward(states, params):
    """Pure-JAX f32 reference for correctness checking."""
    h = jnp.asarray(states, jnp.float32)
    for i, (w, b) in enumerate(params):
        h = h @ w + b
        if i < len(params) - 1:
            h = jnp.maximum(h, 0.0)
    return jax.nn.softmax(h, axis=1)


# TODO(synk): Policy.act (Categorical sampling + log_prob) stays host-side; only forward is kernelized.

if __name__ == "__main__":
    nS, nA = 16, 8
    n_fcs = [32, 32]

    key = jax.random.PRNGKey(0)
    key, k_states, k_state = jax.random.split(key, 3)
    params = init_params(key, nS, nA, n_fcs)
    w1, w_rest, b_packed = pack_params(params)

    # Batched path: non-multiple-of-tile batch exercises padding + multi-step grid.
    B = 300
    states = jax.random.normal(k_states, (B, nS), jnp.float32)
    probs = policy_forward_batched(states, w1, w_rest, b_packed, nA)
    probs = jax.block_until_ready(probs)

    assert probs.shape == (B, nA)
    ref = ref_forward(states, params)
    # bf16 matmuls vs f32 reference -> allow 1e-2; row sums are exact to f32 rounding.
    assert jnp.allclose(probs, ref, atol=1e-2), float(jnp.max(jnp.abs(probs - ref)))
    assert jnp.allclose(jnp.sum(probs, axis=1), 1.0, atol=1e-4)

    # Single-state path (exact Policy.forward semantics -> shape (1, nA)), tiny 8-row tile.
    state = jax.random.normal(k_state, (nS,), jnp.float32)
    p1 = jax.block_until_ready(policy_forward(state, w1, w_rest, b_packed, nA))
    assert p1.shape == (1, nA)
    assert jnp.allclose(p1, ref_forward(state.reshape(1, -1), params), atol=1e-2)
    assert jnp.allclose(jnp.sum(p1, axis=1), 1.0, atol=1e-4)

    print("KERNEL_OK")
</pallas_src>

<mosaic_0001>
module attributes {stable_mosaic.version = 11 : i64} {
  func.func @_mlp_softmax_kernel(%arg0: i32, %arg1: memref<152x16xf32, #tpu.memory_space<vmem>>, %arg2: memref<16x128xbf16, #tpu.memory_space<vmem>>, %arg3: memref<2x128x128xbf16, #tpu.memory_space<vmem>>, %arg4: memref<3x1x128xf32, #tpu.memory_space<vmem>>, %arg5: memref<152x128xf32, #tpu.memory_space<vmem>>) attributes {dimension_semantics = [#tpu.dimension_semantics<parallel>], iteration_bounds = array<i64: 2>, scalar_prefetch = 0 : i64, scratch_operands = 0 : i64, tpu.core_type = #tpu.core_type<tc>, window_params = [{transform_indices = @transform_0, window_bounds = array<i64: 152, 16>}, {pipeline_mode = #tpu.pipeline_mode<synchronous>, transform_indices = @transform_1, window_bounds = array<i64: 16, 128>}, {pipeline_mode = #tpu.pipeline_mode<synchronous>, transform_indices = @transform_2, window_bounds = array<i64: 2, 128, 128>}, {pipeline_mode = #tpu.pipeline_mode<synchronous>, transform_indices = @transform_3, window_bounds = array<i64: 3, 1, 128>}, {transform_indices = @transform_4, window_bounds = array<i64: 152, 128>}]} {
    %c0 = arith.constant 0 : index
    %c0_0 = arith.constant 0 : index
    %0 = vector.load %arg1[%c0, %c0_0] : memref<152x16xf32, #tpu.memory_space<vmem>>, vector<152x16xf32>
    %1 = arith.truncf %0 : vector<152x16xf32> to vector<152x16xbf16>
    %c0_1 = arith.constant 0 : index
    %c0_2 = arith.constant 0 : index
    %2 = vector.load %arg2[%c0_1, %c0_2] : memref<16x128xbf16, #tpu.memory_space<vmem>>, vector<16x128xbf16>
    %cst = arith.constant dense<0.000000e+00> : vector<152x128xf32>
    %3 = tpu.matmul %1, %2, %cst {dimension_numbers = #tpu.dot_dimension_numbers<[1], [0], [0], [1], [0, 0, 1, 1], [], []>} : vector<152x16xbf16>, vector<16x128xbf16>, vector<152x128xf32> -> vector<152x128xf32>
    %c0_3 = arith.constant 0 : index
    %c0_4 = arith.constant 0 : index
    %c0_5 = arith.constant 0 : index
    %4 = vector.load %arg4[%c0_3, %c0_4, %c0_5] : memref<3x1x128xf32, #tpu.memory_space<vmem>>, vector<1x1x128xf32>
    %5 = vector.shape_cast %4 : vector<1x1x128xf32> to vector<1x128xf32>
    %6 = vector.broadcast %5 : vector<1x128xf32> to vector<152x128xf32>
    %7 = arith.addf %3, %6 : vector<152x128xf32>
    %cst_6 = arith.constant 0.000000e+00 : f32
    %8 = vector.broadcast %cst_6 : f32 to vector<152x128xf32>
    %9 = arith.maximumf %7, %8 : vector<152x128xf32>
    %10 = arith.truncf %9 : vector<152x128xf32> to vector<152x128xbf16>
    %c0_7 = arith.constant 0 : index
    %c0_8 = arith.constant 0 : index
    %c0_9 = arith.constant 0 : index
    %11 = vector.load %arg3[%c0_7, %c0_8, %c0_9] : memref<2x128x128xbf16, #tpu.memory_space<vmem>>, vector<1x128x128xbf16>
    %12 = vector.shape_cast %11 : vector<1x128x128xbf16> to vector<128x128xbf16>
    %cst_10 = arith.constant dense<0.000000e+00> : vector<152x128xf32>
    %13 = tpu.matmul %10, %12, %cst_10 {dimension_numbers = #tpu.dot_dimension_numbers<[1], [0], [0], [1], [0, 0, 1, 1], [], []>} : vector<152x128xbf16>, vector<128x128xbf16>, vector<152x128xf32> -> vector<152x128xf32>
    %c1 = arith.constant 1 : index
    %c0_11 = arith.constant 0 : index
    %c0_12 = arith.constant 0 : index
    %14 = vector.load %arg4[%c1, %c0_11, %c0_12] : memref<3x1x128xf32, #tpu.memory_space<vmem>>, vector<1x1x128xf32>
    %15 = vector.shape_cast %14 : vector<1x1x128xf32> to vector<1x128xf32>
    %16 = vector.broadcast %15 : vector<1x128xf32> to vector<152x128xf32>
    %17 = arith.addf %13, %16 : vector<152x128xf32>
    %cst_13 = arith.constant 0.000000e+00 : f32
    %18 = vector.broadcast %cst_13 : f32 to vector<152x128xf32>
    %19 = arith.maximumf %17, %18 : vector<152x128xf32>
    %20 = arith.truncf %19 : vector<152x128xf32> to vector<152x128xbf16>
    %c1_14 = arith.constant 1 : index
    %c0_15 = arith.constant 0 : index
    %c0_16 = arith.constant 0 : index
    %21 = vector.load %arg3[%c1_14, %c0_15, %c0_16] : memref<2x128x128xbf16, #tpu.memory_space<vmem>>, vector<1x128x128xbf16>
    %22 = vector.shape_cast %21 : vector<1x128x128xbf16> to vector<128x128xbf16>
    %cst_17 = arith.constant dense<0.000000e+00> : vector<152x128xf32>
    %23 = tpu.matmul %20, %22, %cst_17 {dimension_numbers = #tpu.dot_dimension_numbers<[1], [0], [0], [1], [0, 0, 1, 1], [], []>} : vector<152x128xbf16>, vector<128x128xbf16>, vector<152x128xf32> -> vector<152x128xf32>
    %c2 = arith.constant 2 : index
    %c0_18 = arith.constant 0 : index
    %c0_19 = arith.constant 0 : index
    %24 = vector.load %arg4[%c2, %c0_18, %c0_19] : memref<3x1x128xf32, #tpu.memory_space<vmem>>, vector<1x1x128xf32>
    %25 = vector.shape_cast %24 : vector<1x1x128xf32> to vector<1x128xf32>
    %26 = vector.broadcast %25 : vector<1x128xf32> to vector<152x128xf32>
    %27 = arith.addf %23, %26 : vector<152x128xf32>
    %28 = tpu.iota {dimensions = array<i32: 1>} : vector<1x128xi32>
    %c8_i32 = arith.constant 8 : i32
    %29 = vector.broadcast %c8_i32 : i32 to vector<1x128xi32>
    %30 = arith.cmpi slt, %28, %29 : vector<1x128xi32>
    %cst_20 = arith.constant 0.000000e+00 : f32
    %cst_21 = arith.constant -1.000000e+30 : f32
    %31 = vector.broadcast %cst_20 : f32 to vector<1x128xf32>
    %32 = vector.broadcast %cst_21 : f32 to vector<1x128xf32>
    %33 = arith.select %30, %31, %32 : vector<1x128xi1>, vector<1x128xf32>
    %34 = vector.broadcast %33 : vector<1x128xf32> to vector<152x128xf32>
    %35 = arith.addf %27, %34 : vector<152x128xf32>
    %cst_22 = arith.constant dense<0xFF800000> : vector<152xf32>
    %36 = vector.multi_reduction <maximumf>, %35, %cst_22 [1] : vector<152x128xf32> to vector<152xf32>
    %37 = vector.shape_cast %36 : vector<152xf32> to vector<152x1xf32>
    %38 = vector.broadcast %37 : vector<152x1xf32> to vector<152x128xf32>
    %39 = arith.subf %35, %38 : vector<152x128xf32>
    %40 = math.exp %39 : vector<152x128xf32>
    %cst_23 = arith.constant dense<0.000000e+00> : vector<152xf32>
    %41 = vector.multi_reduction <add>, %40, %cst_23 [1] : vector<152x128xf32> to vector<152xf32>
    %42 = vector.shape_cast %41 : vector<152xf32> to vector<152x1xf32>
    %43 = tpu.reciprocal %42 : vector<152x1xf32> -> vector<152x1xf32>
    %44 = vector.broadcast %43 : vector<152x1xf32> to vector<152x128xf32>
    %45 = arith.mulf %40, %44 : vector<152x128xf32>
    %c0_24 = arith.constant 0 : index
    %c0_25 = arith.constant 0 : index
    %46 = vector.load %arg5[%c0_24, %c0_25] : memref<152x128xf32, #tpu.memory_space<vmem>>, vector<152x128xf32>
    tpu.vector_store %arg5[%c0_24, %c0_25], %45 {strides = array<i32>} : memref<152x128xf32, #tpu.memory_space<vmem>>, vector<152x128xf32>,
    return
  }
  func.func @transform_0(%arg0: i32) -> (i32, i32) {
    %c0_i32 = arith.constant 0 : i32
    %c0_i32_0 = arith.constant 0 : i32
    return %arg0, %c0_i32 : i32, i32
  }
  func.func @transform_1(%arg0: i32) -> (i32, i32) {
    %c0_i32 = arith.constant 0 : i32
    %c0_i32_0 = arith.constant 0 : i32
    %c0_i32_1 = arith.constant 0 : i32
    return %c0_i32, %c0_i32_0 : i32, i32
  }
  func.func @transform_2(%arg0: i32) -> (i32, i32, i32) {
    %c0_i32 = arith.constant 0 : i32
    %c0_i32_0 = arith.constant 0 : i32
    %c0_i32_1 = arith.constant 0 : i32
    %c0_i32_2 = arith.constant 0 : i32
    return %c0_i32, %c0_i32_0, %c0_i32_1 : i32, i32, i32
  }
  func.func @transform_3(%arg0: i32) -> (i32, i32, i32) {
    %c0_i32 = arith.constant 0 : i32
    %c0_i32_0 = arith.constant 0 : i32
    %c0_i32_1 = arith.constant 0 : i32
    %c0_i32_2 = arith.constant 0 : i32
    return %c0_i32, %c0_i32_0, %c0_i32_1 : i32, i32, i32
  }
  func.func @transform_4(%arg0: i32) -> (i32, i32) {
    %c0_i32 = arith.constant 0 : i32
    %c0_i32_0 = arith.constant 0 : i32
    return %arg0, %c0_i32 : i32, i32
  }
}

</mosaic_0001>

<llo_original>
// kernel: tpu_custom_call.1
$region0: #{tpu_custom_call.1}
  #allocation0 [shape = 'u32[]', space=smem, size = 0x4, offset = 0x4, fixed_abs, tag = 'smem constant byte address 0x4 - core index']
  #allocation1 [shape = 'u32[144,128]{1,0:T(1,128)}', space=vmem, size = 0x12000, scoped, tag = 'internal scratch']
  %s0 = inlined_call_operand.vmem [shape: f32[304,16], index: 0, kind: input, shape index: {}]
  %s1 = inlined_call_operand.vmem [shape: bf16[16,128], index: 1, kind: input, shape index: {}]
  %s2 = inlined_call_operand.vmem [shape: bf16[2,128,128], index: 2, kind: input, shape index: {}]
  %s3 = inlined_call_operand.vmem [shape: f32[3,1,128], index: 3, kind: input, shape index: {}]
  %s4 = inlined_call_operand.hbm [shape: f32[304,128], index: 4, kind: output, shape index: {}]
  %s5 = sld [smem:[#allocation0]]
  $region49: #{tpu_custom_call.1} parent=0
    _
  %s7 = ssub.s32 1, %s5
  %s8 = scalar_select 0, %s7, %s5
  $region1: #{tpu_custom_call.1} parent=0
    #allocation2 [shape = 'u8[155648]{0}', space=vmem, size = 0x26000, scoped, tag = 'output window, operand 0']
    #allocation3 [shape = 's32[2]{0}', space=sflag, size = 0x8, scoped, tag = 'scoped memory for tpu_custom_call.1']
    %9 = vsyncpa [#allocation3], 0
    %s10 = scalar_lea.sflag [#allocation3], 1
    %11 = vsyncpa %s10, 0
    loop: start=0, step=1, limit=4
    $region2: #{tpu_custom_call.1} parent=1 // loop_pre_header
      _
    $region3: #{tpu_custom_call.1} parent=1 // loop_header
      %s13 = sphi 0, %s17
      %p14 = scmp.ge.s32.totalorder %s13, 4
      %s23 = sphi 0, %s25
      %s26 = sphi 0, %s23
      %s27 = sphi 0, %s26
      %s43 = sphi 0, %s27
      %s47 = sphi 0, %s47
      %s49 = sphi 0, %s47
      %s50 = sphi 0, %s49
      %s64 = sphi 0, %s50
      %s68 = sphi 0, %s68
      %s70 = sphi 0, %s68
      %s71 = sphi 0, %s70
      %s85 = sphi 0, %s71
      %s89 = sphi 0, %s89
      %s91 = sphi 0, %s89
      %s92 = sphi 0, %s91
      %s106 = sphi 0, %s92
      %s112 = sphi 0, %s114
      %s115 = sphi 0, %s112
      %s116 = sphi 0, %s115
      %s132 = sphi 0, %s116
    $region4: #{tpu_custom_call.1} parent=1 // loop_header_branch
      %16 = sbr.rel (%p14) target = $region8
    $region5: #{tpu_custom_call.1} parent=1 // loop_body
      %s18 = ssub.s32 %s13, 1
      %s19 = ssub.s32 %s13, 2
      %s20 = sadd.s32 %s13, 1
      %s21 = ssub.s32 %s13, %s20
      %p22 = scmp.eq.s32.totalorder %s21, 0
      %s24 = sadd.s32 %s23, 1
      %s25 = scalar_select %p22, %s23, %s24
      %p28 = pneg %p22
      %p29 = scmp.eq.s32.totalorder %s13, 1
      %p30 = por %p28, %p29
      %p31 = scmp.ne.s32.totalorder %s23, %s26
      %p32 = scmp.eq.s32.totalorder %s13, 0
      %p33 = por %p31, %p32
      %p34 = scmp.ne.s32.totalorder %s23, %s26
      %p35 = scmp.eq.s32.totalorder %s18, 1
      %p36 = por %p34, %p35
      %p37 = scmp.ne.s32.totalorder %s26, %s27
      %p38 = scmp.eq.s32.totalorder %s18, 0
      %p39 = por %p37, %p38
      %p40 = scmp.ne.s32.totalorder %s26, %s27
      %p41 = scmp.eq.s32.totalorder %s19, 1
      %p42 = por %p40, %p41
      %p44 = scmp.ne.s32.totalorder %s27, %s43
      %p45 = scmp.eq.s32.totalorder %s19, 0
      %p46 = por %p44, %p45
      %s48 = sadd.s32 %s47, 1
      %p51 = scmp.eq.s32.totalorder %s13, 1
      %p52 = scmp.ne.s32.totalorder %s47, %s49
      %p53 = scmp.eq.s32.totalorder %s13, 0
      %p54 = por %p52, %p53
      %p55 = scmp.ne.s32.totalorder %s47, %s49
      %p56 = scmp.eq.s32.totalorder %s18, 1
      %p57 = por %p55, %p56
      %p58 = scmp.ne.s32.totalorder %s49, %s50
      %p59 = scmp.eq.s32.totalorder %s18, 0
      %p60 = por %p58, %p59
      %p61 = scmp.ne.s32.totalorder %s49, %s50
      %p62 = scmp.eq.s32.totalorder %s19, 1
      %p63 = por %p61, %p62
      %p65 = scmp.ne.s32.totalorder %s50, %s64
      %p66 = scmp.eq.s32.totalorder %s19, 0
      %p67 = por %p65, %p66
      %s69 = sadd.s32 %s68, 1
      %p72 = scmp.eq.s32.totalorder %s13, 1
      %p73 = scmp.ne.s32.totalorder %s68, %s70
      %p74 = scmp.eq.s32.totalorder %s13, 0
      %p75 = por %p73, %p74
      %p76 = scmp.ne.s32.totalorder %s68, %s70
      %p77 = scmp.eq.s32.totalorder %s18, 1
      %p78 = por %p76, %p77
      %p79 = scmp.ne.s32.totalorder %s70, %s71
      %p80 = scmp.eq.s32.totalorder %s18, 0
      %p81 = por %p79, %p80
      %p82 = scmp.ne.s32.totalorder %s70, %s71
      %p83 = scmp.eq.s32.totalorder %s19, 1
      %p84 = por %p82, %p83
      %p86 = scmp.ne.s32.totalorder %s71, %s85
      %p87 = scmp.eq.s32.totalorder %s19, 0
      %p88 = por %p86, %p87
      %s90 = sadd.s32 %s89, 1
      %p93 = scmp.eq.s32.totalorder %s13, 1
      %p94 = scmp.ne.s32.totalorder %s89, %s91
      %p95 = scmp.eq.s32.totalorder %s13, 0
      %p96 = por %p94, %p95
      %p97 = scmp.ne.s32.totalorder %s89, %s91
      %p98 = scmp.eq.s32.totalorder %s18, 1
      %p99 = por %p97, %p98
      %p100 = scmp.ne.s32.totalorder %s91, %s92
      %p101 = scmp.eq.s32.totalorder %s18, 0
      %p102 = por %p100, %p101
      %p103 = scmp.ne.s32.totalorder %s91, %s92
      %p104 = scmp.eq.s32.totalorder %s19, 1
      %p105 = por %p103, %p104
      %p107 = scmp.ne.s32.totalorder %s92, %s106
      %p108 = scmp.eq.s32.totalorder %s19, 0
      %p109 = por %p107, %p108
      %s110 = ssub.s32 %s13, %s20
      %p111 = scmp.eq.s32.totalorder %s110, 0
      %s113 = sadd.s32 %s112, 1
      %s114 = scalar_select %p111, %s112, %s113
      %p117 = pneg %p111
      %p118 = scmp.eq.s32.totalorder %s13, 1
      %p119 = por %p117, %p118
      %p120 = scmp.ne.s32.totalorder %s112, %s115
      %p121 = scmp.eq.s32.totalorder %s13, 0
      %p122 = por %p120, %p121
      %p123 = scmp.ne.s32.totalorder %s112, %s115
      %p124 = scmp.eq.s32.totalorder %s18, 1
      %p125 = por %p123, %p124
      %p126 = scmp.ne.s32.totalorder %s115, %s116
      %p127 = scmp.eq.s32.totalorder %s18, 0
      %p128 = por %p126, %p127
      %p129 = scmp.ne.s32.totalorder %s115, %s116
      %p130 = scmp.eq.s32.totalorder %s19, 1
      %p131 = por %p129, %p130
      %p133 = scmp.ne.s32.totalorder %s116, %s132
      %p134 = scmp.eq.s32.totalorder %s19, 0
      %p135 = por %p133, %p134
      %p136 = scmp.le.s32.totalorder 1, %s13
      %p137 = scmp.lt.s32.totalorder %s13, 3
      %p138 = pnand %p136, %p137
      %p139 = pneg %p138
      // Predicated region
      $region9: #{tpu_custom_call.1} parent=5 // pred_check
        _
      $region10: #{tpu_custom_call.1} parent=5 // pred_check_branch
        %141 = sbr.rel (%p138) target = $region12
      $region11: #{tpu_custom_call.1} parent=5 // pred_region
        %s142 = ssub.s32 %s13, 1
        // Predicated region
        $region13: #{tpu_custom_call.1} parent=11 // pred_check
          %p143 = pneg %p60
        $region14: #{tpu_custom_call.1} parent=11 // pred_check_branch
          %145 = sbr.rel (%p143) target = $region16
        $region15: #{tpu_custom_call.1} parent=11 // pred_region
          _
        $region16: #{tpu_custom_call.1} parent=11 // pred_fallthru
          _
        // Predicated region
        $region17: #{tpu_custom_call.1} parent=11 // pred_check
          %p146 = pneg %p81
        $region18: #{tpu_custom_call.1} parent=11 // pred_check_branch
          %148 = sbr.rel (%p146) target = $region20
        $region19: #{tpu_custom_call.1} parent=11 // pred_region
          _
        $region20: #{tpu_custom_call.1} parent=11 // pred_fallthru
          _
        // Predicated region
        $region21: #{tpu_custom_call.1} parent=11 // pred_check
          %p149 = pneg %p102
        $region22: #{tpu_custom_call.1} parent=11 // pred_check_branch
          %151 = sbr.rel (%p149) target = $region24
        $region23: #{tpu_custom_call.1} parent=11 // pred_region
          _
        $region24: #{tpu_custom_call.1} parent=11 // pred_fallthru
          _
      $region12: #{tpu_custom_call.1} parent=5 // pred_fallthru
        _
      %p152 = scmp.lt.s32.totalorder %s13, 2
      // Predicated region
      $region25: #{tpu_custom_call.1} parent=5 // pred_check
        %p153 = pneg %p152
      $region26: #{tpu_custom_call.1} parent=5 // pred_check_branch
        %155 = sbr.rel (%p153) target = $region28
      $region27: #{tpu_custom_call.1} parent=5 // pred_region
        // Predicated region
        $region29: #{tpu_custom_call.1} parent=27 // pred_check
          %p156 = pneg %p33
        $region30: #{tpu_custom_call.1} parent=27 // pred_check_branch
          %158 = sbr.rel (%p156) target = $region32
        $region31: #{tpu_custom_call.1} parent=27 // pred_region
          %s159 = smul.u32 19, %s13
          %p160 = scmp.lt.s32.totalorder %s159, 37
          %s161 = scalar_select %p160, %s159, 37
          %s162 = smul.addr %s161, 8
          %s163 = scalar_lea.vmem %s0, %s162
          %s164 = smul.u32 19, %s13
        $region32: #{tpu_custom_call.1} parent=27 // pred_fallthru
          _
      $region28: #{tpu_custom_call.1} parent=5 // pred_fallthru
        _
      %p165 = scmp.le.s32.totalorder 1, %s13
      %p166 = scmp.lt.s32.totalorder %s13, 3
      %p167 = pnand %p165, %p166
      %p168 = pneg %p167
      // Predicated region
      $region33: #{tpu_custom_call.1} parent=5 // pred_check
        _
      $region34: #{tpu_custom_call.1} parent=5 // pred_check_branch
        %170 = sbr.rel (%p167) target = $region36
      $region35: #{tpu_custom_call.1} parent=5 // pred_region
        %s171 = ssub.s32 %s13, 1
        %s172 = smul.u32 19, %s18
        %p173 = scmp.lt.s32.totalorder %s172, 37
        %s174 = scalar_select %p173, %s172, 37
        %s175 = smul.addr %s174, 8
        %s176 = scalar_lea.vmem %s0, %s175
        %p177 = pneg %p39
        %p178 = pneg %p36
        %p179 = pneg %p60
        %p180 = pneg %p57
        %p181 = pneg %p81
        %p182 = pneg %p78
        %p183 = pneg %p102
        %p184 = pneg %p99
        %p185 = pneg %p128
        %p186 = pneg %p125
        %s187 = sand.u32 %s115, 1
        %s188 = scalar_lea.sflag [#allocation3], %s187
        %s189 = sand.u32 %s115, 1
        %s190 = smul.addr %s189, 152
        %s191 = scalar_lea.vmem [#allocation2], %s190
        %s192 = smul.u32 19, %s18
        %p193 = scmp.lt.s32.totalorder %s192, 37
        %s194 = scalar_select %p193, %s192, 37
        %s195 = smul.addr %s194, 8
        %s196 = scalar_lea.vmem %s0, %s195
        %s197 = smul.u32 19, %s18
        %s198 = smul.u32 19, %s18
        %v200 = vld [vmem:[%s196] sm:$0xff]
        %v201 = vld [vmem:[%s196 + $0x8] sm:$0xff]
        %v202 = vld [vmem:[%s196 + $0x10] sm:$0xff]
        %v203 = vld [vmem:[%s196 + $0x18] sm:$0xff]
        %v204 = vld [vmem:[%s196 + $0x20] sm:$0xff]
        %v205 = vld [vmem:[%s196 + $0x28] sm:$0xff]
        %v206 = vld [vmem:[%s196 + $0x30] sm:$0xff]
        %v207 = vld [vmem:[%s196 + $0x38] sm:$0xff]
        %v208 = vld [vmem:[%s196 + $0x40] sm:$0xff]
        %v209 = vld [vmem:[%s196 + $0x48] sm:$0xff]
        %v210 = vld [vmem:[%s196 + $0x50] sm:$0xff]
        %v211 = vld [vmem:[%s196 + $0x58] sm:$0xff]
        %v212 = vld [vmem:[%s196 + $0x60] sm:$0xff]
        %v213 = vld [vmem:[%s196 + $0x68] sm:$0xff]
        %v214 = vld [vmem:[%s196 + $0x70] sm:$0xff]
        %v215 = vld [vmem:[%s196 + $0x78] sm:$0xff]
        %v216 = vld [vmem:[%s196 + $0x80] sm:$0xff]
        %v217 = vld [vmem:[%s196 + $0x88] sm:$0xff]
        %v218 = vld [vmem:[%s196 + $0x90] sm:$0xff]
        %v219 = vpack.c.bf16 %v201, %v200
        %v220 = vpack.c.bf16 %v203, %v202
        %v221 = vpack.c.bf16 %v205, %v204
        %v222 = vpack.c.bf16 %v207, %v206
        %v223 = vpack.c.bf16 %v209, %v208
        %v224 = vpack.c.bf16 %v211, %v210
        %v225 = vpack.c.bf16 %v213, %v212
        %v226 = vpack.c.bf16 %v215, %v214
        %v227 = vpack.c.bf16 %v217, %v216
        %v228 = vpack.c.bf16 %v218, %v218
        %v229 = vld [vmem:[%s1] sm:$0xf]
        %v230 = vld [vmem:[%s1 + $0x4] sm:$0xf]
        %v231 = vld [vmem:[%s3] sm:$0x1]
        %v233 = vlaneseq
        %v234 = vshrl.u32 %v233, 7
        %v235 = vsub.s32 0, %v234
        %v236 = vrot.slane %v231, %v235
        %v240 = vunpack.c.l.b16 %v229
        %v241 = vunpack.c.l.b16 %v230
        %v242 = vpack.c.b16 %v241, %v240
        %vm244 = vcmask 130048
        %v246 = vsel %vm244, %v219, 0
        %v249 = vsel %vm244, %v220, 0
        %v252 = vsel %vm244, %v221, 0
        %v255 = vsel %vm244, %v222, 0
        %v258 = vsel %vm244, %v223, 0
        %v261 = vsel %vm244, %v224, 0
        %v264 = vsel %vm244, %v225, 0
        %v267 = vsel %vm244, %v226, 0
        %v270 = vsel %vm244, %v227, 0
        %v273 = vsel %vm244, %v228, 0
        %275 = vmatprep.subr.bf16.mxu0 0
        %276 = vmatpush1.bf16.msra.mxu0 %v242
        %277 = vmatprep.subr.bf16.mxu0 0
        %278 = vmatpush1.bf16.msra.mxu0 0
        %279 = vmatprep.subr.bf16.mxu0 0
        %280 = vmatpush1.bf16.msra.mxu0 0
        %281 = vmatprep.subr.bf16.mxu0 0
        %282 = vmatpush1.bf16.msra.mxu0 0
        %283 = vmatprep.subr.bf16.mxu0 0
        %284 = vmatpush1.bf16.msra.mxu0 0
        %285 = vmatprep.subr.bf16.mxu0 0
        %286 = vmatpush1.bf16.msra.mxu0 0
        %287 = vmatprep.subr.bf16.mxu0 0
        %288 = vmatpush1.bf16.msra.mxu0 0
        %289 = vmatprep.subr.bf16.mxu0 0
        %290 = vmatpush1.bf16.msra.mxu0 0
        %291 = vmatprep.subr.bf16.mxu0 0
        %292 = vmatpush1.bf16.msra.mxu0 0
        %293 = vmatprep.subr.bf16.mxu0 0
        %294 = vmatpush1.bf16.msra.mxu0 0
        %295 = vmatprep.subr.bf16.mxu0 0
        %296 = vmatpush1.bf16.msra.mxu0 0
        %297 = vmatprep.subr.bf16.mxu0 0
        %298 = vmatpush1.bf16.msra.mxu0 0
        %299 = vmatprep.subr.bf16.mxu0 0
        %300 = vmatpush1.bf16.msra.mxu0 0
        %301 = vmatprep.subr.bf16.mxu0 0
        %302 = vmatpush1.bf16.msra.mxu0 0
        %303 = vmatprep.subr.bf16.mxu0 0
        %304 = vmatpush1.bf16.msra.mxu0 0
        %305 = vmatprep.subr.bf16.mxu0 0
        %306 = vmatpush1.bf16.msra.mxu0 0
        %307 = vmatprep.mubr.bf16.mxu0 0
        %308 = vmatmul.mubr.bf16.gmra.mrb[0].mxu0 %v246
        %v309 = vpop.f32.mrb[0].mxu0
        %v310 = vadd.f32 %v236, %v309
        %v311 = vpop.f32.mrb[0].mxu0
        %v312 = vpop.f32.mrb[0].mxu0
        %v313 = vadd.f32 %v236, %v312
        %v314 = vpop.f32.mrb[0].mxu0
        %315 = vmatprep.mubr.bf16.mxu0 0
        %316 = vmatmul.mubr.bf16.gmra.mrb[0].mxu0 %v249
        %v317 = vpop.f32.mrb[0].mxu0
        %v318 = vadd.f32 %v236, %v317
        %v319 = vpop.f32.mrb[0].mxu0
        %v320 = vpop.f32.mrb[0].mxu0
        %v321 = vadd.f32 %v236, %v320
        %v322 = vpop.f32.mrb[0].mxu0
        %323 = vmatprep.mubr.bf16.mxu0 0
        %324 = vmatmul.mubr.bf16.gmra.mrb[0].mxu0 %v252
        %v325 = vpop.f32.mrb[0].mxu0
        %v326 = vadd.f32 %v236, %v325
        %v327 = vpop.f32.mrb[0].mxu0
        %v328 = vpop.f32.mrb[0].mxu0
        %v329 = vadd.f32 %v236, %v328
        %v330 = vpop.f32.mrb[0].mxu0
        %331 = vmatprep.mubr.bf16.mxu0 0
        %332 = vmatmul.mubr.bf16.gmra.mrb[0].mxu0 %v255
        %v333 = vpop.f32.mrb[0].mxu0
        %v334 = vadd.f32 %v236, %v333
        %v335 = vpop.f32.mrb[0].mxu0
        %v336 = vpop.f32.mrb[0].mxu0
        %v337 = vadd.f32 %v236, %v336
        %v338 = vpop.f32.mrb[0].mxu0
        %339 = vmatprep.mubr.bf16.mxu0 0
        %340 = vmatmul.mubr.bf16.gmra.mrb[0].mxu0 %v258
        %v341 = vpop.f32.mrb[0].mxu0
        %v342 = vadd.f32 %v236, %v341
        %v343 = vpop.f32.mrb[0].mxu0
        %v344 = vpop.f32.mrb[0].mxu0
        %v345 = vadd.f32 %v236, %v344
        %v346 = vpop.f32.mrb[0].mxu0
        %347 = vmatprep.mubr.bf16.mxu0 0
        %348 = vmatmul.mubr.bf16.gmra.mrb[0].mxu0 %v261
        %v349 = vpop.f32.mrb[0].mxu0
        %v350 = vadd.f32 %v236, %v349
        %v351 = vpop.f32.mrb[0].mxu0
        %v352 = vpop.f32.mrb[0].mxu0
        %v353 = vadd.f32 %v236, %v352
        %v354 = vpop.f32.mrb[0].mxu0
        %355 = vmatprep.mubr.bf16.mxu0 0
        %356 = vmatmul.mubr.bf16.gmra.mrb[0].mxu0 %v264
        %v357 = vpop.f32.mrb[0].mxu0
        %v358 = vadd.f32 %v236, %v357
        %v359 = vpop.f32.mrb[0].mxu0
        %v360 = vpop.f32.mrb[0].mxu0
        %v361 = vadd.f32 %v236, %v360
        %v362 = vpop.f32.mrb[0].mxu0
        %363 = vmatprep.mubr.bf16.mxu0 0
        %364 = vmatmul.mubr.bf16.gmra.mrb[0].mxu0 %v267
        %v365 = vpop.f32.mrb[0].mxu0
        %v366 = vadd.f32 %v236, %v365
        %v367 = vpop.f32.mrb[0].mxu0
        %v368 = vpop.f32.mrb[0].mxu0
        %v369 = vadd.f32 %v236, %v368
        %v370 = vpop.f32.mrb[0].mxu0
        %371 = vmatprep.mubr.bf16.mxu0 0
        %372 = vmatmul.mubr.bf16.gmra.mrb[0].mxu0 %v270
        %v373 = vpop.f32.mrb[0].mxu0
        %v374 = vadd.f32 %v236, %v373
        %v375 = vpop.f32.mrb[0].mxu0
        %v376 = vpop.f32.mrb[0].mxu0
        %v377 = vadd.f32 %v236, %v376
        %v378 = vpop.f32.mrb[0].mxu0
        %379 = vmatprep.mubr.bf16.mxu0 0
        %380 = vmatmul.mubr.bf16.gmra.mrb[0].mxu0 %v273
        %v381 = vpop.f32.mrb[0].mxu0
        %v382 = vadd.f32 %v236, %v381
        %v383 = vpop.f32.mrb[0].mxu0
        %v384 = vpop.f32.mrb[0].mxu0
        %v385 = vpop.f32.mrb[0].mxu0
        %386 = vdwg.mxu0
        %v387 = vmax.f32 %v310, 0.0
        %v388 = vmax.f32 %v313, 0.0
        %v389 = vmax.f32 %v318, 0.0
        %v390 = vmax.f32 %v321, 0.0
        %v391 = vmax.f32 %v326, 0.0
        %v392 = vmax.f32 %v329, 0.0
        %v393 = vmax.f32 %v334, 0.0
        %v394 = vmax.f32 %v337, 0.0
        %v395 = vmax.f32 %v342, 0.0
        %v396 = vmax.f32 %v345, 0.0
        %v397 = vmax.f32 %v350, 0.0
        %v398 = vmax.f32 %v353, 0.0
        %v399 = vmax.f32 %v358, 0.0
        %v400 = vmax.f32 %v361, 0.0
        %v401 = vmax.f32 %v366, 0.0
        %v402 = vmax.f32 %v369, 0.0
        %v403 = vmax.f32 %v374, 0.0
        %v404 = vmax.f32 %v377, 0.0
        %v405 = vmax.f32 %v382, 0.0
        %v406 = vpack.c.bf16 %v388, %v387
        %v407 = vpack.c.bf16 %v390, %v389
        %v408 = vpack.c.bf16 %v392, %v391
        %v409 = vpack.c.bf16 %v394, %v393
        %v410 = vpack.c.bf16 %v396, %v395
        %v411 = vpack.c.bf16 %v398, %v397
        %v412 = vpack.c.bf16 %v400, %v399
        %v413 = vpack.c.bf16 %v402, %v401
        %v414 = vpack.c.bf16 %v404, %v403
        %v415 = vpack.c.bf16 %v405, %v405
        %v416 = vld [vmem:[%s2] sm:$0xf]
        %v417 = vld [vmem:[%s2 + $0x4] sm:$0xf]
        %v418 = vld [vmem:[%s2 + $0x8] sm:$0xf]
        %v419 = vld [vmem:[%s2 + $0xc] sm:$0xf]
        %v420 = vld [vmem:[%s2 + $0x10] sm:$0xf]
        %v421 = vld [vmem:[%s2 + $0x14] sm:$0xf]
        %v422 = vld [vmem:[%s2 + $0x18] sm:$0xf]
        %v423 = vld [vmem:[%s2 + $0x1c] sm:$0xf]
        %v424 = vld [vmem:[%s2 + $0x20] sm:$0xf]
        %v425 = vld [vmem:[%s2 + $0x24] sm:$0xf]
        %v426 = vld [vmem:[%s2 + $0x28] sm:$0xf]
        %v427 = vld [vmem:[%s2 + $0x2c] sm:$0xf]
        %v428 = vld [vmem:[%s2 + $0x30] sm:$0xf]
        %v429 = vld [vmem:[%s2 + $0x34] sm:$0xf]
        %v430 = vld [vmem:[%s2 + $0x38] sm:$0xf]
        %v431 = vld [vmem:[%s2 + $0x3c] sm:$0xf]
        %s432 = scalar_lea.vmem %s3, 1
        %v433 = vld [vmem:[%s432] sm:$0x1]
        %v435 = vlaneseq
        %v436 = vshrl.u32 %v435, 7
        %v437 = vsub.s32 0, %v436
        %v438 = vrot.slane %v433, %v437
        %v456 = vunpack.c.l.b16 %v416
        %v457 = vunpack.c.l.b16 %v417
        %v458 = vunpack.c.l.b16 %v418
        %v459 = vunpack.c.l.b16 %v419
        %v460 = vunpack.c.l.b16 %v420
        %v461 = vunpack.c.l.b16 %v421
        %v462 = vunpack.c.l.b16 %v422
        %v463 = vunpack.c.l.b16 %v423
        %v464 = vunpack.c.l.b16 %v424
        %v465 = vunpack.c.l.b16 %v425
        %v466 = vunpack.c.l.b16 %v426
        %v467 = vunpack.c.l.b16 %v427
        %v468 = vunpack.c.l.b16 %v428
        %v469 = vunpack.c.l.b16 %v429
        %v470 = vunpack.c.l.b16 %v430
        %v471 = vunpack.c.l.b16 %v431
        %v472 = vpack.c.b16 %v457, %v456
        %v473 = vpack.c.b16 %v459, %v458
        %v474 = vpack.c.b16 %v461, %v460
        %v475 = vpack.c.b16 %v463, %v462
        %v476 = vpack.c.b16 %v465, %v464
        %v477 = vpack.c.b16 %v467, %v466
        %v478 = vpack.c.b16 %v469, %v468
        %v479 = vpack.c.b16 %v471, %v470
        %488 = vmatprep.subr.bf16.mxu0 0
        %489 = vmatpush1.bf16.msra.mxu0 %v472
        %490 = vmatprep.subr.bf16.mxu0 0
        %491 = vmatpush1.bf16.msra.mxu0 %v473
        %492 = vmatprep.subr.bf16.mxu0 0
        %493 = vmatpush1.bf16.msra.mxu0 %v474
        %494 = vmatprep.subr.bf16.mxu0 0
        %495 = vmatpush1.bf16.msra.mxu0 %v475
        %496 = vmatprep.subr.bf16.mxu0 0
        %497 = vmatpush1.bf16.msra.mxu0 %v476
        %498 = vmatprep.subr.bf16.mxu0 0
        %499 = vmatpush1.bf16.msra.mxu0 %v477
        %500 = vmatprep.subr.bf16.mxu0 0
        %501 = vmatpush1.bf16.msra.mxu0 %v478
        %502 = vmatprep.subr.bf16.mxu0 0
        %503 = vmatpush1.bf16.msra.mxu0 %v479
        %504 = vmatprep.subr.bf16.mxu0 0
        %505 = vmatpush1.bf16.msra.mxu0 0
        %506 = vmatprep.subr.bf16.mxu0 0
        %507 = vmatpush1.bf16.msra.mxu0 0
        %508 = vmatprep.subr.bf16.mxu0 0
        %509 = vmatpush1.bf16.msra.mxu0 0
        %510 = vmatprep.subr.bf16.mxu0 0
        %511 = vmatpush1.bf16.msra.mxu0 0
        %512 = vmatprep.subr.bf16.mxu0 0
        %513 = vmatpush1.bf16.msra.mxu0 0
        %514 = vmatprep.subr.bf16.mxu0 0
        %515 = vmatpush1.bf16.msra.mxu0 0
        %516 = vmatprep.subr.bf16.mxu0 0
        %517 = vmatpush1.bf16.msra.mxu0 0
        %518 = vmatprep.subr.bf16.mxu0 0
        %519 = vmatpush1.bf16.msra.mxu0 0
        %520 = vmatprep.mubr.bf16.mxu0 0
        %521 = vmatmul.mubr.bf16.gmra.mrb[0].mxu0 %v406
        %v522 = vpop.f32.mrb[0].mxu0
        %v523 = vadd.f32 %v438, %v522
        %v524 = vpop.f32.mrb[0].mxu0
        %v525 = vpop.f32.mrb[0].mxu0
        %v526 = vadd.f32 %v438, %v525
        %v527 = vpop.f32.mrb[0].mxu0
        %528 = vmatprep.mubr.bf16.mxu0 0
        %529 = vmatmul.mubr.bf16.gmra.mrb[0].mxu0 %v407
        %v530 = vpop.f32.mrb[0].mxu0
        %v531 = vadd.f32 %v438, %v530
        %v532 = vpop.f32.mrb[0].mxu0
        %v533 = vpop.f32.mrb[0].mxu0
        %v534 = vadd.f32 %v438, %v533
        %v535 = vpop.f32.mrb[0].mxu0
        %536 = vmatprep.mubr.bf16.mxu0 0
        %537 = vmatmul.mubr.bf16.gmra.mrb[0].mxu0 %v408
        %v538 = vpop.f32.mrb[0].mxu0
        %v539 = vadd.f32 %v438, %v538
        %v540 = vpop.f32.mrb[0].mxu0
        %v541 = vpop.f32.mrb[0].mxu0
        %v542 = vadd.f32 %v438, %v541
        %v543 = vpop.f32.mrb[0].mxu0
        %544 = vmatprep.mubr.bf16.mxu0 0
        %545 = vmatmul.mubr.bf16.gmra.mrb[0].mxu0 %v409
        %v546 = vpop.f32.mrb[0].mxu0
        %v547 = vadd.f32 %v438, %v546
        %v548 = vpop.f32.mrb[0].mxu0
        %v549 = vpop.f32.mrb[0].mxu0
        %v550 = vadd.f32 %v438, %v549
        %v551 = vpop.f32.mrb[0].mxu0
        %552 = vmatprep.mubr.bf16.mxu0 0
        %553 = vmatmul.mubr.bf16.gmra.mrb[0].mxu0 %v410
        %v554 = vpop.f32.mrb[0].mxu0
        %v555 = vadd.f32 %v438, %v554
        %v556 = vpop.f32.mrb[0].mxu0
        %v557 = vpop.f32.mrb[0].mxu0
        %v558 = vadd.f32 %v438, %v557
        %v559 = vpop.f32.mrb[0].mxu0
        %560 = vmatprep.mubr.bf16.mxu0 0
        %561 = vmatmul.mubr.bf16.gmra.mrb[0].mxu0 %v411
        %v562 = vpop.f32.mrb[0].mxu0
        %v563 = vadd.f32 %v438, %v562
        %v564 = vpop.f32.mrb[0].mxu0
        %v565 = vpop.f32.mrb[0].mxu0
        %v566 = vadd.f32 %v438, %v565
        %v567 = vpop.f32.mrb[0].mxu0
        %568 = vmatprep.mubr.bf16.mxu0 0
        %569 = vmatmul.mubr.bf16.gmra.mrb[0].mxu0 %v412
        %v570 = vpop.f32.mrb[0].mxu0
        %v571 = vadd.f32 %v438, %v570
        %v572 = vpop.f32.mrb[0].mxu0
        %v573 = vpop.f32.mrb[0].mxu0
        %v574 = vadd.f32 %v438, %v573
        %v575 = vpop.f32.mrb[0].mxu0
        %576 = vmatprep.mubr.bf16.mxu0 0
        %577 = vmatmul.mubr.bf16.gmra.mrb[0].mxu0 %v413
        %v578 = vpop.f32.mrb[0].mxu0
        %v579 = vadd.f32 %v438, %v578
        %v580 = vpop.f32.mrb[0].mxu0
        %v581 = vpop.f32.mrb[0].mxu0
        %v582 = vadd.f32 %v438, %v581
        %v583 = vpop.f32.mrb[0].mxu0
        %584 = vmatprep.mubr.bf16.mxu0 0
        %585 = vmatmul.mubr.bf16.gmra.mrb[0].mxu0 %v414
        %v586 = vpop.f32.mrb[0].mxu0
        %v587 = vadd.f32 %v438, %v586
        %v588 = vpop.f32.mrb[0].mxu0
        %v589 = vpop.f32.mrb[0].mxu0
        %v590 = vadd.f32 %v438, %v589
        %v591 = vpop.f32.mrb[0].mxu0
        %592 = vmatprep.mubr.bf16.mxu0 0
        %593 = vmatmul.mubr.bf16.gmra.mrb[0].mxu0 %v415
        %v594 = vpop.f32.mrb[0].mxu0
        %v595 = vadd.f32 %v438, %v594
        %v596 = vpop.f32.mrb[0].mxu0
        %v597 = vpop.f32.mrb[0].mxu0
        %v598 = vpop.f32.mrb[0].mxu0
        %599 = vdwg.mxu0
        %v600 = vmax.f32 %v523, 0.0
        %v601 = vmax.f32 %v526, 0.0
        %v602 = vmax.f32 %v531, 0.0
        %v603 = vmax.f32 %v534, 0.0
        %v604 = vmax.f32 %v539, 0.0
        %v605 = vmax.f32 %v542, 0.0
        %v606 = vmax.f32 %v547, 0.0
        %v607 = vmax.f32 %v550, 0.0
        %v608 = vmax.f32 %v555, 0.0
        %v609 = vmax.f32 %v558, 0.0
        %v610 = vmax.f32 %v563, 0.0
        %v611 = vmax.f32 %v566, 0.0
        %v612 = vmax.f32 %v571, 0.0
        %v613 = vmax.f32 %v574, 0.0
        %v614 = vmax.f32 %v579, 0.0
        %v615 = vmax.f32 %v582, 0.0
        %v616 = vmax.f32 %v587, 0.0
        %v617 = vmax.f32 %v590, 0.0
        %v618 = vmax.f32 %v595, 0.0
        %v619 = vpack.c.bf16 %v601, %v600
        %v620 = vpack.c.bf16 %v603, %v602
        %v621 = vpack.c.bf16 %v605, %v604
        %v622 = vpack.c.bf16 %v607, %v606
        %v623 = vpack.c.bf16 %v609, %v608
        %v624 = vpack.c.bf16 %v611, %v610
        %v625 = vpack.c.bf16 %v613, %v612
        %v626 = vpack.c.bf16 %v615, %v614
        %v627 = vpack.c.bf16 %v617, %v616
        %v628 = vpack.c.bf16 %v618, %v618
        %s629 = scalar_lea.vmem %s2, 64
        %v630 = vld [vmem:[%s629] sm:$0xf]
        %v631 = vld [vmem:[%s629 + $0x4] sm:$0xf]
        %v632 = vld [vmem:[%s629 + $0x8] sm:$0xf]
        %v633 = vld [vmem:[%s629 + $0xc] sm:$0xf]
        %v634 = vld [vmem:[%s629 + $0x10] sm:$0xf]
        %v635 = vld [vmem:[%s629 + $0x14] sm:$0xf]
        %v636 = vld [vmem:[%s629 + $0x18] sm:$0xf]
        %v637 = vld [vmem:[%s629 + $0x1c] sm:$0xf]
        %v638 = vld [vmem:[%s629 + $0x20] sm:$0xf]
        %v639 = vld [vmem:[%s629 + $0x24] sm:$0xf]
        %v640 = vld [vmem:[%s629 + $0x28] sm:$0xf]
        %v641 = vld [vmem:[%s629 + $0x2c] sm:$0xf]
        %v642 = vld [vmem:[%s629 + $0x30] sm:$0xf]
        %v643 = vld [vmem:[%s629 + $0x34] sm:$0xf]
        %v644 = vld [vmem:[%s629 + $0x38] sm:$0xf]
        %v645 = vld [vmem:[%s629 + $0x3c] sm:$0xf]
        %s646 = scalar_lea.vmem %s3, 2
        %v647 = vld [vmem:[%s646] sm:$0x1]
        %v649 = vlaneseq
        %v650 = vshrl.u32 %v649, 7
        %v651 = vsub.s32 0, %v650
        %v652 = vrot.slane %v647, %v651
        %v670 = vunpack.c.l.b16 %v630
        %v671 = vunpack.c.l.b16 %v631
        %v672 = vunpack.c.l.b16 %v632
        %v673 = vunpack.c.l.b16 %v633
        %v674 = vunpack.c.l.b16 %v634
        %v675 = vunpack.c.l.b16 %v635
        %v676 = vunpack.c.l.b16 %v636
        %v677 = vunpack.c.l.b16 %v637
        %v678 = vunpack.c.l.b16 %v638
        %v679 = vunpack.c.l.b16 %v639
        %v680 = vunpack.c.l.b16 %v640
        %v681 = vunpack.c.l.b16 %v641
        %v682 = vunpack.c.l.b16 %v642
        %v683 = vunpack.c.l.b16 %v643
        %v684 = vunpack.c.l.b16 %v644
        %v685 = vunpack.c.l.b16 %v645
        %v686 = vpack.c.b16 %v671, %v670
        %v687 = vpack.c.b16 %v673, %v672
        %v688 = vpack.c.b16 %v675, %v674
        %v689 = vpack.c.b16 %v677, %v676
        %v690 = vpack.c.b16 %v679, %v678
        %v691 = vpack.c.b16 %v681, %v680
        %v692 = vpack.c.b16 %v683, %v682
        %v693 = vpack.c.b16 %v685, %v684
        %702 = vmatprep.subr.bf16.mxu0 0
        %703 = vmatpush1.bf16.msra.mxu0 %v686
        %704 = vmatprep.subr.bf16.mxu0 0
        %705 = vmatpush1.bf16.msra.mxu0 %v687
        %706 = vmatprep.subr.bf16.mxu0 0
        %707 = vmatpush1.bf16.msra.mxu0 %v688
        %708 = vmatprep.subr.bf16.mxu0 0
        %709 = vmatpush1.bf16.msra.mxu0 %v689
        %710 = vmatprep.subr.bf16.mxu0 0
        %711 = vmatpush1.bf16.msra.mxu0 %v690
        %712 = vmatprep.subr.bf16.mxu0 0
        %713 = vmatpush1.bf16.msra.mxu0 %v691
        %714 = vmatprep.subr.bf16.mxu0 0
        %715 = vmatpush1.bf16.msra.mxu0 %v692
        %716 = vmatprep.subr.bf16.mxu0 0
        %717 = vmatpush1.bf16.msra.mxu0 %v693
        %718 = vmatprep.subr.bf16.mxu0 0
        %719 = vmatpush1.bf16.msra.mxu0 0
        %720 = vmatprep.subr.bf16.mxu0 0
        %721 = vmatpush1.bf16.msra.mxu0 0
        %722 = vmatprep.subr.bf16.mxu0 0
        %723 = vmatpush1.bf16.msra.mxu0 0
        %724 = vmatprep.subr.bf16.mxu0 0
        %725 = vmatpush1.bf16.msra.mxu0 0
        %726 = vmatprep.subr.bf16.mxu0 0
        %727 = vmatpush1.bf16.msra.mxu0 0
        %728 = vmatprep.subr.bf16.mxu0 0
        %729 = vmatpush1.bf16.msra.mxu0 0
        %730 = vmatprep.subr.bf16.mxu0 0
        %731 = vmatpush1.bf16.msra.mxu0 0
        %732 = vmatprep.subr.bf16.mxu0 0
        %733 = vmatpush1.bf16.msra.mxu0 0
        %734 = vmatprep.mubr.bf16.mxu0 0
        %735 = vmatmul.mubr.bf16.gmra.mrb[0].mxu0 %v619
        %v736 = vpop.f32.mrb[0].mxu0
        %v737 = vadd.f32 %v652, %v736
        %v738 = vpop.f32.mrb[0].mxu0
        %v739 = vpop.f32.mrb[0].mxu0
        %v740 = vadd.f32 %v652, %v739
        %v741 = vpop.f32.mrb[0].mxu0
        %742 = vmatprep.mubr.bf16.mxu0 0
        %743 = vmatmul.mubr.bf16.gmra.mrb[0].mxu0 %v620
        %v744 = vpop.f32.mrb[0].mxu0
        %v745 = vadd.f32 %v652, %v744
        %v746 = vpop.f32.mrb[0].mxu0
        %v747 = vpop.f32.mrb[0].mxu0
        %v748 = vadd.f32 %v652, %v747
        %v749 = vpop.f32.mrb[0].mxu0
        %750 = vmatprep.mubr.bf16.mxu0 0
        %751 = vmatmul.mubr.bf16.gmra.mrb[0].mxu0 %v621
        %v752 = vpop.f32.mrb[0].mxu0
        %v753 = vadd.f32 %v652, %v752
        %v754 = vpop.f32.mrb[0].mxu0
        %v755 = vpop.f32.mrb[0].mxu0
        %v756 = vadd.f32 %v652, %v755
        %v757 = vpop.f32.mrb[0].mxu0
        %758 = vmatprep.mubr.bf16.mxu0 0
        %759 = vmatmul.mubr.bf16.gmra.mrb[0].mxu0 %v622
        %v760 = vpop.f32.mrb[0].mxu0
        %v761 = vadd.f32 %v652, %v760
        %v762 = vpop.f32.mrb[0].mxu0
        %v763 = vpop.f32.mrb[0].mxu0
        %v764 = vadd.f32 %v652, %v763
        %v765 = vpop.f32.mrb[0].mxu0
        %766 = vmatprep.mubr.bf16.mxu0 0
        %767 = vmatmul.mubr.bf16.gmra.mrb[0].mxu0 %v623
        %v768 = vpop.f32.mrb[0].mxu0
        %v769 = vadd.f32 %v652, %v768
        %v770 = vpop.f32.mrb[0].mxu0
        %v771 = vpop.f32.mrb[0].mxu0
        %v772 = vadd.f32 %v652, %v771
        %v773 = vpop.f32.mrb[0].mxu0
        %774 = vmatprep.mubr.bf16.mxu0 0
        %775 = vmatmul.mubr.bf16.gmra.mrb[0].mxu0 %v624
        %v776 = vpop.f32.mrb[0].mxu0
        %v777 = vadd.f32 %v652, %v776
        %v778 = vpop.f32.mrb[0].mxu0
        %v779 = vpop.f32.mrb[0].mxu0
        %v780 = vadd.f32 %v652, %v779
        %v781 = vpop.f32.mrb[0].mxu0
        %782 = vmatprep.mubr.bf16.mxu0 0
        %783 = vmatmul.mubr.bf16.gmra.mrb[0].mxu0 %v625
        %v784 = vpop.f32.mrb[0].mxu0
        %v785 = vadd.f32 %v652, %v784
        %v786 = vpop.f32.mrb[0].mxu0
        %v787 = vpop.f32.mrb[0].mxu0
        %v788 = vadd.f32 %v652, %v787
        %v789 = vpop.f32.mrb[0].mxu0
        %790 = vmatprep.mubr.bf16.mxu0 0
        %791 = vmatmul.mubr.bf16.gmra.mrb[0].mxu0 %v626
        %v792 = vpop.f32.mrb[0].mxu0
        %v793 = vadd.f32 %v652, %v792
        %v794 = vpop.f32.mrb[0].mxu0
        %v795 = vpop.f32.mrb[0].mxu0
        %v796 = vadd.f32 %v652, %v795
        %v797 = vpop.f32.mrb[0].mxu0
        %798 = vmatprep.mubr.bf16.mxu0 0
        %799 = vmatmul.mubr.bf16.gmra.mrb[0].mxu0 %v627
        %v800 = vpop.f32.mrb[0].mxu0
        %v801 = vadd.f32 %v652, %v800
        %v802 = vpop.f32.mrb[0].mxu0
        %v803 = vpop.f32.mrb[0].mxu0
        %v804 = vadd.f32 %v652, %v803
        %v805 = vpop.f32.mrb[0].mxu0
        %806 = vmatprep.mubr.bf16.mxu0 0
        %807 = vmatmul.mubr.bf16.gmra.mrb[0].mxu0 %v628
        %v808 = vpop.f32.mrb[0].mxu0
        %v809 = vadd.f32 %v652, %v808
        %v810 = vpop.f32.mrb[0].mxu0
        %v811 = vpop.f32.mrb[0].mxu0
        %v812 = vpop.f32.mrb[0].mxu0
        %813 = vdwg.mxu0
        %v814 = vlaneseq
        %v815 = vand.u32 %v814, 127
        %vm816 = vcmp.lt.s32.totalorder %v815, 8
        %v817 = vsel %vm816, 0.0, -1e+30
        %v818 = vadd.f32 %v737, %v817
        %v819 = vadd.f32 %v740, %v817
        %v820 = vadd.f32 %v745, %v817
        %v821 = vadd.f32 %v748, %v817
        %v822 = vadd.f32 %v753, %v817
        %v823 = vadd.f32 %v756, %v817
        %v824 = vadd.f32 %v761, %v817
        %v825 = vadd.f32 %v764, %v817
        %v826 = vadd.f32 %v769, %v817
        %v827 = vadd.f32 %v772, %v817
        %v828 = vadd.f32 %v777, %v817
        %v829 = vadd.f32 %v780, %v817
        %v830 = vadd.f32 %v785, %v817
        %v831 = vadd.f32 %v788, %v817
        %v832 = vadd.f32 %v793, %v817
        %v833 = vadd.f32 %v796, %v817
        %v834 = vadd.f32 %v801, %v817
        %v835 = vadd.f32 %v804, %v817
        %v836 = vadd.f32 %v809, %v817
        %837 = vmax.xlane.f32.xlu0 %v818
        %v838 = vpop.xlane.xlu0 %837
        %839 = vmax.xlane.f32.xlu0 %v819
        %v840 = vpop.xlane.xlu0 %839
        %841 = vmax.xlane.f32.xlu0 %v820
        %v842 = vpop.xlane.xlu0 %841
        %843 = vmax.xlane.f32.xlu0 %v821
        %v844 = vpop.xlane.xlu0 %843
        %845 = vmax.xlane.f32.xlu0 %v822
        %v846 = vpop.xlane.xlu0 %845
        %847 = vmax.xlane.f32.xlu0 %v823
        %v848 = vpop.xlane.xlu0 %847
        %849 = vmax.xlane.f32.xlu0 %v824
        %v850 = vpop.xlane.xlu0 %849
        %851 = vmax.xlane.f32.xlu0 %v825
        %v852 = vpop.xlane.xlu0 %851
        %853 = vmax.xlane.f32.xlu0 %v826
        %v854 = vpop.xlane.xlu0 %853
        %855 = vmax.xlane.f32.xlu0 %v827
        %v856 = vpop.xlane.xlu0 %855
        %857 = vmax.xlane.f32.xlu0 %v828
        %v858 = vpop.xlane.xlu0 %857
        %859 = vmax.xlane.f32.xlu0 %v829
        %v860 = vpop.xlane.xlu0 %859
        %861 = vmax.xlane.f32.xlu0 %v830
        %v862 = vpop.xlane.xlu0 %861
        %863 = vmax.xlane.f32.xlu0 %v831
        %v864 = vpop.xlane.xlu0 %863
        %865 = vmax.xlane.f32.xlu0 %v832
        %v866 = vpop.xlane.xlu0 %865
        %867 = vmax.xlane.f32.xlu0 %v833
        %v868 = vpop.xlane.xlu0 %867
        %869 = vmax.xlane.f32.xlu0 %v834
        %v870 = vpop.xlane.xlu0 %869
        %871 = vmax.xlane.f32.xlu0 %v835
        %v872 = vpop.xlane.xlu0 %871
        %873 = vmax.xlane.f32.xlu0 %v836
        %v874 = vpop.xlane.xlu0 %873
        %v875 = vsub.f32 %v818, %v838
        %v876 = vsub.f32 %v819, %v840
        %v877 = vsub.f32 %v820, %v842
        %v878 = vsub.f32 %v821, %v844
        %v879 = vsub.f32 %v822, %v846
        %v880 = vsub.f32 %v823, %v848
        %v881 = vsub.f32 %v824, %v850
        %v882 = vsub.f32 %v825, %v852
        %v883 = vsub.f32 %v826, %v854
        %v884 = vsub.f32 %v827, %v856
        %v885 = vsub.f32 %v828, %v858
        %v886 = vsub.f32 %v829, %v860
        %v887 = vsub.f32 %v830, %v862
        %v888 = vsub.f32 %v831, %v864
        %v889 = vsub.f32 %v832, %v866
        %v890 = vsub.f32 %v833, %v868
        %v891 = vsub.f32 %v834, %v870
        %v892 = vsub.f32 %v835, %v872
        %v893 = vsub.f32 %v836, %v874
        %v894 = vmul.f32 %v875, 1.442695
        %v895 = vpow.pop %v894
        %v896 = vmul.f32 %v876, 1.442695
        %v897 = vpow.pop %v896
        %v898 = vmul.f32 %v877, 1.442695
        %v899 = vpow.pop %v898
        %v900 = vmul.f32 %v878, 1.442695
        %v901 = vpow.pop %v900
        %v902 = vmul.f32 %v879, 1.442695
        %v903 = vpow.pop %v902
        %v904 = vmul.f32 %v880, 1.442695
        %v905 = vpow.pop %v904
        %v906 = vmul.f32 %v881, 1.442695
        %v907 = vpow.pop %v906
        %v908 = vmul.f32 %v882, 1.442695
        %v909 = vpow.pop %v908
        %v910 = vmul.f32 %v883, 1.442695
        %v911 = vpow.pop %v910
        %v912 = vmul.f32 %v884, 1.442695
        %v913 = vpow.pop %v912
        %v914 = vmul.f32 %v885, 1.442695
        %v915 = vpow.pop %v914
        %v916 = vmul.f32 %v886, 1.442695
        %v917 = vpow.pop %v916
        %v918 = vmul.f32 %v887, 1.442695
        %v919 = vpow.pop %v918
        %v920 = vmul.f32 %v888, 1.442695
        %v921 = vpow.pop %v920
        %v922 = vmul.f32 %v889, 1.442695
        %v923 = vpow.pop %v922
        %v924 = vmul.f32 %v890, 1.442695
        %v925 = vpow.pop %v924
        %v926 = vmul.f32 %v891, 1.442695
        %v927 = vpow.pop %v926
        %v928 = vmul.f32 %v892, 1.442695
        %v929 = vpow.pop %v928
        %v930 = vmul.f32 %v893, 1.442695
        %v931 = vpow.pop %v930
        %932 = vadd.xlane.f32.xlu0 %v895
        %v933 = vpop.xlane.xlu0 %932
        %934 = vadd.xlane.f32.xlu0 %v897
        %v935 = vpop.xlane.xlu0 %934
        %936 = vadd.xlane.f32.xlu0 %v899
        %v937 = vpop.xlane.xlu0 %936
        %938 = vadd.xlane.f32.xlu0 %v901
        %v939 = vpop.xlane.xlu0 %938
        %940 = vadd.xlane.f32.xlu0 %v903
        %v941 = vpop.xlane.xlu0 %940
        %942 = vadd.xlane.f32.xlu0 %v905
        %v943 = vpop.xlane.xlu0 %942
        %944 = vadd.xlane.f32.xlu0 %v907
        %v945 = vpop.xlane.xlu0 %944
        %946 = vadd.xlane.f32.xlu0 %v909
        %v947 = vpop.xlane.xlu0 %946
        %948 = vadd.xlane.f32.xlu0 %v911
        %v949 = vpop.xlane.xlu0 %948
        %950 = vadd.xlane.f32.xlu0 %v913
        %v951 = vpop.xlane.xlu0 %950
        %952 = vadd.xlane.f32.xlu0 %v915
        %v953 = vpop.xlane.xlu0 %952
        %954 = vadd.xlane.f32.xlu0 %v917
        %v955 = vpop.xlane.xlu0 %954
        %956 = vadd.xlane.f32.xlu0 %v919
        %v957 = vpop.xlane.xlu0 %956
        %958 = vadd.xlane.f32.xlu0 %v921
        %v959 = vpop.xlane.xlu0 %958
        %960 = vadd.xlane.f32.xlu0 %v923
        %v961 = vpop.xlane.xlu0 %960
        %962 = vadd.xlane.f32.xlu0 %v925
        %v963 = vpop.xlane.xlu0 %962
        %964 = vadd.xlane.f32.xlu0 %v927
        %v965 = vpop.xlane.xlu0 %964
        %966 = vadd.xlane.f32.xlu0 %v929
        %v967 = vpop.xlane.xlu0 %966
        %968 = vadd.xlane.f32.xlu0 %v931
        %v969 = vpop.xlane.xlu0 %968
        %v970 = vrcp.pop %v933
        %v971 = vrcp.pop %v935
        %v972 = vrcp.pop %v937
        %v973 = vrcp.pop %v939
        %v974 = vrcp.pop %v941
        %v975 = vrcp.pop %v943
        %v976 = vrcp.pop %v945
        %v977 = vrcp.pop %v947
        %v978 = vrcp.pop %v949
        %v979 = vrcp.pop %v951
        %v980 = vrcp.pop %v953
        %v981 = vrcp.pop %v955
        %v982 = vrcp.pop %v957
        %v983 = vrcp.pop %v959
        %v984 = vrcp.pop %v961
        %v985 = vrcp.pop %v963
        %v986 = vrcp.pop %v965
        %v987 = vrcp.pop %v967
        %v988 = vrcp.pop %v969
        %v989 = vmul.f32 %v895, %v970
        %v990 = vmul.f32 %v897, %v971
        %v991 = vmul.f32 %v899, %v972
        %v992 = vmul.f32 %v901, %v973
        %v993 = vmul.f32 %v903, %v974
        %v994 = vmul.f32 %v905, %v975
        %v995 = vmul.f32 %v907, %v976
        %v996 = vmul.f32 %v909, %v977
        %v997 = vmul.f32 %v911, %v978
        %v998 = vmul.f32 %v913, %v979
        %v999 = vmul.f32 %v915, %v980
        %v1000 = vmul.f32 %v917, %v981
        %v1001 = vmul.f32 %v919, %v982
        %v1002 = vmul.f32 %v921, %v983
        %v1003 = vmul.f32 %v923, %v984
        %v1004 = vmul.f32 %v925, %v985
        %v1005 = vmul.f32 %v927, %v986
        %v1006 = vmul.f32 %v929, %v987
        %v1007 = vmul.f32 %v931, %v988
        %1008 = vst [vmem:[%s191] sm:$0xff] %v989
        %1009 = vst [vmem:[%s191 + $0x8] sm:$0xff] %v990
        %1010 = vst [vmem:[%s191 + $0x10] sm:$0xff] %v991
        %1011 = vst [vmem:[%s191 + $0x18] sm:$0xff] %v992
        %1012 = vst [vmem:[%s191 + $0x20] sm:$0xff] %v993
        %1013 = vst [vmem:[%s191 + $0x28] sm:$0xff] %v994
        %1014 = vst [vmem:[%s191 + $0x30] sm:$0xff] %v995
        %1015 = vst [vmem:[%s191 + $0x38] sm:$0xff] %v996
        %1016 = vst [vmem:[%s191 + $0x40] sm:$0xff] %v997
        %1017 = vst [vmem:[%s191 + $0x48] sm:$0xff] %v998
        %1018 = vst [vmem:[%s191 + $0x50] sm:$0xff] %v999
        %1019 = vst [vmem:[%s191 + $0x58] sm:$0xff] %v1000
        %1020 = vst [vmem:[%s191 + $0x60] sm:$0xff] %v1001
        %1021 = vst [vmem:[%s191 + $0x68] sm:$0xff] %v1002
        %1022 = vst [vmem:[%s191 + $0x70] sm:$0xff] %v1003
        %1023 = vst [vmem:[%s191 + $0x78] sm:$0xff] %v1004
        %1024 = vst [vmem:[%s191 + $0x80] sm:$0xff] %v1005
        %1025 = vst [vmem:[%s191 + $0x88] sm:$0xff] %v1006
        %1026 = vst [vmem:[%s191 + $0x90] sm:$0xff] %v1007
        %s1027 = sand.u32 %s115, 1
        %s1028 = scalar_lea.sflag [#allocation3], %s1027
        %s1029 = sand.u32 %s115, 1
        %s1030 = smul.addr %s1029, 152
        %s1031 = scalar_lea.vmem [#allocation2], %s1030
        // Predicated region
        $region37: #{tpu_custom_call.1} parent=35 // pred_check
          %p1032 = pneg %p125
        $region38: #{tpu_custom_call.1} parent=35 // pred_check_branch
          %1034 = sbr.rel (%p1032) target = $region40
        $region39: #{tpu_custom_call.1} parent=35 // pred_region
          %s1035 = smul.u32 19, %s18
          %s1037 = ssub.s32 2432, 2432
          %1038 = vsyncadd %s1028, %s1037
          %s1039 = smul.addr %s1035, 128
          %s1040 = scalar_lea.hbm %s4, %s1039
          %s1041 = sshll.u32 %s1031, 4
          %s1042 = int_to_ptr.vmem [resolvable:$true] %s1041
          %1047 = dma.vmem_to_hbm [thread:$0]  %s1042, 2432, %s1040, %s1028, 128, 128, 8
        $region40: #{tpu_custom_call.1} parent=35 // pred_fallthru
          _
      $region36: #{tpu_custom_call.1} parent=5 // pred_fallthru
        _
      %p1048 = scmp.le.s32.totalorder 2, %s13
      // Predicated region
      $region41: #{tpu_custom_call.1} parent=5 // pred_check
        %p1049 = pneg %p1048
      $region42: #{tpu_custom_call.1} parent=5 // pred_check_branch
        %1051 = sbr.rel (%p1049) target = $region44
      $region43: #{tpu_custom_call.1} parent=5 // pred_region
        %s1052 = ssub.s32 %s13, 2
        // Predicated region
        $region45: #{tpu_custom_call.1} parent=43 // pred_check
          %p1053 = pneg %p131
        $region46: #{tpu_custom_call.1} parent=43 // pred_check_branch
          %1055 = sbr.rel (%p1053) target = $region48
        $region47: #{tpu_custom_call.1} parent=43 // pred_region
          %s1056 = sand.u32 %s116, 1
          %s1057 = scalar_lea.sflag [#allocation3], %s1056
          %s1058 = sand.u32 %s116, 1
          %s1059 = smul.addr %s1058, 152
          %s1060 = scalar_lea.vmem [#allocation2], %s1059
          %1061 = dma.done %s1057, 2432
        $region48: #{tpu_custom_call.1} parent=43 // pred_fallthru
          _
      $region44: #{tpu_custom_call.1} parent=5 // pred_fallthru
        _
    $region6: #{tpu_custom_call.1} parent=1 // loop_footer
      %s17 = sadd.s32 1, %s13
    $region7: #{tpu_custom_call.1} parent=1 // loop_footer_branch
      %12 = sbr.rel target = $region3
    $region8: #{tpu_custom_call.1} parent=1 // loop_exit
      _
    %1062 = vsyncpa [#allocation3], 1
    %s1063 = scalar_lea.sflag [#allocation3], 1
    %1064 = vsyncpa %s1063, 1

</llo_original>
